<compile_context>
chip_gen: v7x
topology: tpu7x:2x2x1
jax: 0.10.0
libtpu: 0.0.40
codegen_flags: <defaults>
</compile_context>

<pallas_src>
import math
import numpy as np

import jax
import jax.numpy as jnp
from jax import lax
from jax.experimental import pallas as pl
from jax.experimental.pallas import tpu as pltpu

_FILT_COEFFS = {
    1: [1.0],
    2: [1.0, 1.0],
    3: [1.0, 2.0, 1.0],
    4: [1.0, 3.0, 3.0, 1.0],
    5: [1.0, 4.0, 6.0, 4.0, 1.0],
    6: [1.0, 5.0, 10.0, 10.0, 5.0, 1.0],
    7: [1.0, 6.0, 15.0, 20.0, 15.0, 6.0, 1.0],
}

_PAD_MODE = {"reflect": "reflect", "refl": "reflect",
             "replicate": "edge", "repl": "edge",
             "zero": "constant"}


# --------------------------------------------------------------------------- #
# Host-side helpers
# --------------------------------------------------------------------------- #
def _roundup(x, m):
    return ((x + m - 1) // m) * m


def _sublane(itemsize):
    return {4: 8, 2: 16, 1: 32}.get(int(itemsize), 8)


def _vmem_budget():
    """(vmem_limit_bytes, per-step in+out target). Conservative across gens."""
    try:
        cap = int(pltpu.get_tpu_info().vmem_capacity_bytes)
    except Exception:
        cap = 64 << 20                          # v7x per-TC VMEM (tightest gen)
    limit = min(cap * 3 // 4, 100 << 20)        # ~48 MiB on v7x, ~96 MiB v5e/v6e
    per_step = max(4 << 20, min(12 << 20, limit // 6))
    return int(limit), int(per_step)


def _pick_tb(nc, per_row_bytes, per_step_target, row_multiple=1):
    """Rows per grid step: as big as the per-step VMEM target allows; keep >=2
    grid steps (megacore) only when there is plenty of work per step."""
    tb = max(1, int(per_step_target // max(per_row_bytes, 1)))
    tb = min(nc, tb)
    if tb < nc and row_multiple > 1:
        tb = min(nc, max(row_multiple, (tb // row_multiple) * row_multiple))
    if tb == nc and nc >= 4 * row_multiple and nc * per_row_bytes >= (2 << 20):
        half = (nc + 1) // 2
        if row_multiple > 1:
            half = max(row_multiple, (half // row_multiple) * row_multiple)
        if half < nc and half * per_row_bytes >= (1 << 20):
            tb = half
    return tb


def _pass_matrix(in_size, pad_lo, pad_hi, filt_1d, stride, pad_type):
    """(in_size, out_size) matrix folding pad + 1-D blur + stride decimation."""
    if pad_type in ("reflect", "refl") and (pad_lo >= in_size or pad_hi >= in_size):
        raise ValueError("reflect padding size must be smaller than the input size")
    K = len(filt_1d)
    out_size = (in_size + pad_lo + pad_hi - K) // stride + 1
    mat = np.zeros((in_size, out_size), dtype=np.float32)
    for j in range(out_size):
        for t in range(K):
            o = j * stride + t - pad_lo          # index on the *unpadded* axis
            if o < 0:
                if pad_type in ("reflect", "refl"):
                    o = -o
                elif pad_type in ("replicate", "repl"):
                    o = 0
                else:                            # zero pad: tap contributes 0
                    continue
            elif o >= in_size:
                if pad_type in ("reflect", "refl"):
                    o = 2 * (in_size - 1) - o
                elif pad_type in ("replicate", "repl"):
                    o = in_size - 1
                else:
                    continue
            mat[o, j] += float(filt_1d[t])
    return mat, out_size


# --------------------------------------------------------------------------- #
# Kernels
# --------------------------------------------------------------------------- #
def _kron_kernel(bfull_ref, x_ref, o_ref):
    # x: (TB, H*W), bfull: (H*W, Ho*Wo) -> o: (TB, Ho*Wo). One lane-dense matmul.
    x = x_ref[...].astype(bfull_ref.dtype)
    o_ref[...] = jnp.dot(x, bfull_ref[...],
                         preferred_element_type=jnp.float32).astype(o_ref.dtype)


def _sep_batched_kernel(bw_ref, bh_ref, x_ref, o_ref):
    # bw: (W, Wo), bh: (H, Ho), x: (TB, H, W) -> o: (TB, Ho, Wo)
    # Two block-level matmuls (whole block at once); requires H and Wo aligned
    # to the sublane granule so the leading-dim merges/splits keep the layout.
    tb, h, w = x_ref.shape
    ho, wo = o_ref.shape[1], o_ref.shape[2]
    cdt = bw_ref.dtype
    x = x_ref[...].astype(cdt)
    y = jnp.dot(x.reshape(tb * h, w), bw_ref[...],
                preferred_element_type=jnp.float32)                 # (TB*H, Wo)
    y = y.reshape(tb, h, wo).astype(cdt)
    yt = jnp.swapaxes(y, 1, 2).reshape(tb * wo, h)                  # (TB*Wo, H)
    z = jnp.dot(yt, bh_ref[...], preferred_element_type=jnp.float32)  # (TB*Wo, Ho)
    o_ref[...] = jnp.swapaxes(z.reshape(tb, wo, ho), 1, 2).astype(o_ref.dtype)


def _sep_loop_kernel(bw_ref, bh_ref, x_ref, o_ref):
    # Fallback when H / Wo are not sublane-aligned: per-image 2-D matmuls under
    # a fori_loop (bounds vreg live ranges; only used for large images where the
    # kernel is HBM-bound anyway). bw: (W, Wo), bh: (Ho, H).
    cdt = bw_ref.dtype
    bw = bw_ref[...]
    bh = bh_ref[...]

    def body(b, carry):
        xb = x_ref[b].astype(cdt)                                           # (H, W)
        y = jnp.dot(xb, bw, preferred_element_type=jnp.float32)             # (H, Wo)
        z = jnp.dot(bh, y.astype(cdt), preferred_element_type=jnp.float32)  # (Ho, Wo)
        o_ref[b] = z.astype(o_ref.dtype)
        return carry

    lax.fori_loop(0, x_ref.shape[0], body, 0)


# --------------------------------------------------------------------------- #
# Wrapper (forward pass of BlurPoolND with dims=2)
# --------------------------------------------------------------------------- #
def blurpool2d(x_nchw, *, filt_size=4, stride=2, pad_off=0, pad_type="reflect"):
    N, C, H, W = x_nchw.shape

    # filt_size == 1: the module never convolves -- (optional pad +) subsample.
    if filt_size == 1:
        if pad_off == 0:
            return x_nchw[:, :, ::stride, ::stride]
        xp = jnp.pad(x_nchw, ((0, 0), (0, 0), (pad_off, pad_off), (pad_off, pad_off)),
                     mode=_PAD_MODE[pad_type])
        return xp[:, :, ::stride, ::stride]

    pad_lo = (filt_size - 1) // 2 + pad_off
    pad_hi = int(math.ceil((filt_size - 1) / 2.0)) + pad_off

    a = np.asarray(_FILT_COEFFS[filt_size], dtype=np.float64)
    f1 = a / a.sum()                                       # normalized 1-D filter

    bh_np, Ho = _pass_matrix(H, pad_lo, pad_hi, f1, stride, pad_type)   # (H, Ho)
    bw_np, Wo = _pass_matrix(W, pad_lo, pad_hi, f1, stride, pad_type)   # (W, Wo)

    xdt = jnp.dtype(x_nchw.dtype)
    compute_dtype = xdt if xdt in (jnp.dtype(jnp.float32), jnp.dtype(jnp.bfloat16)) \
        else jnp.dtype(jnp.float32)
    itemsize = xdt.itemsize
    sub_in = _sublane(itemsize)
    sub_c = 16 if compute_dtype == jnp.dtype(jnp.bfloat16) else 8

    NC = N * C
    HW, HoWo = H * W, Ho * Wo
    vmem_limit, per_step_target = _vmem_budget()
    cparams = pltpu.CompilerParams(dimension_semantics=("parallel",),
                                   vmem_limit_bytes=vmem_limit)

    # ---- small-spatial path: one Kronecker-folded, lane-dense matmul per block
    if Wo < 128 and HW * HoWo * 4 <= (4 << 20):
        bfull = jnp.asarray(np.kron(bh_np, bw_np), dtype=compute_dtype)  # (HW, HoWo)
        per_row = (_roundup(HW, 128) + _roundup(HoWo, 128)) * itemsize
        TB = _pick_tb(NC, per_row, per_step_target, row_multiple=sub_in)
        out = pl.pallas_call(
            _kron_kernel,
            out_shape=jax.ShapeDtypeStruct((NC, HoWo), xdt),
            grid=(pl.cdiv(NC, TB),),
            in_specs=[
                pl.BlockSpec((HW, HoWo), lambda i: (0, 0)),   # folded blur matrix
                pl.BlockSpec((TB, HW), lambda i: (i, 0)),     # fused (N*C) rows
            ],
            out_specs=pl.BlockSpec((TB, HoWo), lambda i: (i, 0)),
            compiler_params=cparams,
        )(bfull, x_nchw.reshape(NC, HW))
        return out.reshape(N, C, Ho, Wo)

    # ---- large-spatial path: two separable block-level matmuls -----------------
    per_img = (_roundup(H, sub_in) * _roundup(W, 128)
               + _roundup(Ho, sub_in) * _roundup(Wo, 128)) * itemsize
    per_img += 2 * _roundup(H, 8) * _roundup(Wo, 128) * 4     # f32 intermediate y
    TB = _pick_tb(NC, per_img, per_step_target, row_multiple=1)
    # TODO(synk): for very large single images (> ~12 MiB) tile Ho with a second
    # grid axis exploiting Bh's banded structure instead of full-H blocks.

    bw = jnp.asarray(bw_np, dtype=compute_dtype)              # (W, Wo)
    aligned = (H % sub_c == 0) and (Wo % sub_c == 0)
    if aligned:
        kernel = _sep_batched_kernel
        bh = jnp.asarray(bh_np, dtype=compute_dtype)          # (H, Ho)  RHS form
        bh_block = (H, Ho)
    else:
        kernel = _sep_loop_kernel
        bh = jnp.asarray(bh_np.T, dtype=compute_dtype)        # (Ho, H)  LHS form
        bh_block = (Ho, H)

    out = pl.pallas_call(
        kernel,
        out_shape=jax.ShapeDtypeStruct((NC, Ho, Wo), xdt),
        grid=(pl.cdiv(NC, TB),),
        in_specs=[
            pl.BlockSpec((W, Wo), lambda i: (0, 0)),
            pl.BlockSpec(bh_block, lambda i: (0, 0)),
            pl.BlockSpec((TB, H, W), lambda i: (i, 0, 0)),
        ],
        out_specs=pl.BlockSpec((TB, Ho, Wo), lambda i: (i, 0, 0)),
        compiler_params=cparams,
    )(bw, bh, x_nchw.reshape(NC, H, W))
    return out.reshape(N, C, Ho, Wo)


# --------------------------------------------------------------------------- #
# Pure-JAX reference (pad + grouped conv, mirrors F.conv2d(..., groups=C))
# --------------------------------------------------------------------------- #
def _reference_blurpool2d(x_nchw, *, filt_size=4, stride=2, pad_off=0, pad_type="reflect"):
    N, C, H, W = x_nchw.shape
    if filt_size == 1:
        if pad_off == 0:
            return x_nchw[:, :, ::stride, ::stride]
        xp = jnp.pad(x_nchw, ((0, 0), (0, 0), (pad_off, pad_off), (pad_off, pad_off)),
                     mode=_PAD_MODE[pad_type])
        return xp[:, :, ::stride, ::stride]
    pad_lo = (filt_size - 1) // 2 + pad_off
    pad_hi = int(math.ceil((filt_size - 1) / 2.0)) + pad_off
    a = jnp.asarray(_FILT_COEFFS[filt_size], dtype=jnp.float32)
    filt2d = a[:, None] * a[None, :]
    filt2d = filt2d / jnp.sum(filt2d)
    xpad = jnp.pad(x_nchw.astype(jnp.float32),
                   ((0, 0), (0, 0), (pad_lo, pad_hi), (pad_lo, pad_hi)),
                   mode=_PAD_MODE[pad_type])
    w = jnp.tile(filt2d[None, None, :, :], (C, 1, 1, 1))        # (C, 1, K, K)
    out = lax.conv_general_dilated(
        xpad, w, window_strides=(stride, stride), padding="VALID",
        dimension_numbers=("NCHW", "OIHW", "NCHW"), feature_group_count=C)
    return out.astype(x_nchw.dtype)


if __name__ == "__main__":
    # Primary config of the module: filt_size=4, stride=2, reflect pad (NCHW).
    x = jax.random.normal(jax.random.PRNGKey(0), (2, 4, 16, 16), dtype=jnp.float32)
    out = jax.block_until_ready(blurpool2d(x))                  # Kronecker path
    assert out.shape == (2, 4, 8, 8), out.shape
    ref = _reference_blurpool2d(x)
    assert jnp.allclose(out, ref, atol=1e-5, rtol=1e-5), float(jnp.max(jnp.abs(out - ref)))

    # Larger spatial size -> separable batched-matmul path.
    x2 = jax.random.normal(jax.random.PRNGKey(1), (2, 4, 64, 96), dtype=jnp.float32)
    out2 = jax.block_until_ready(blurpool2d(x2, pad_type="replicate"))
    ref2 = _reference_blurpool2d(x2, pad_type="replicate")
    assert out2.shape == (2, 4, 32, 48), out2.shape
    assert jnp.allclose(out2, ref2, atol=1e-5, rtol=1e-5), float(jnp.max(jnp.abs(out2 - ref2)))

    # Unaligned spatial size -> separable fori_loop fallback path.
    x3 = jax.random.normal(jax.random.PRNGKey(2), (1, 2, 50, 70), dtype=jnp.float32)
    out3 = jax.block_until_ready(blurpool2d(x3, filt_size=3, pad_type="zero"))
    ref3 = _reference_blurpool2d(x3, filt_size=3, pad_type="zero")
    assert out3.shape == ref3.shape, (out3.shape, ref3.shape)
    assert jnp.allclose(out3, ref3, atol=1e-5, rtol=1e-5), float(jnp.max(jnp.abs(out3 - ref3)))

    print("KERNEL_OK")
</pallas_src>

<mosaic_0001>
module attributes {stable_mosaic.version = 11 : i64} {
  func.func @_kron_kernel(%arg0: i32, %arg1: memref<256x64xf32, #tpu.memory_space<vmem>>, %arg2: memref<8x256xf32, #tpu.memory_space<vmem>>, %arg3: memref<8x64xf32, #tpu.memory_space<vmem>>) attributes {dimension_semantics = [#tpu.dimension_semantics<parallel>], iteration_bounds = array<i64: 1>, scalar_prefetch = 0 : i64, scratch_operands = 0 : i64, tpu.core_type = #tpu.core_type<tc>, window_params = [{pipeline_mode = #tpu.pipeline_mode<synchronous>, transform_indices = @transform_0, window_bounds = array<i64: 256, 64>}, {transform_indices = @transform_1, window_bounds = array<i64: 8, 256>}, {transform_indices = @transform_2, window_bounds = array<i64: 8, 64>}]} {
    %c0 = arith.constant 0 : index
    %c0_0 = arith.constant 0 : index
    %0 = vector.load %arg2[%c0, %c0_0] : memref<8x256xf32, #tpu.memory_space<vmem>>, vector<8x256xf32>
    %c0_1 = arith.constant 0 : index
    %c0_2 = arith.constant 0 : index
    %1 = vector.load %arg1[%c0_1, %c0_2] : memref<256x64xf32, #tpu.memory_space<vmem>>, vector<256x64xf32>
    %cst = arith.constant dense<0.000000e+00> : vector<8x64xf32>
    %2 = tpu.matmul %0, %1, %cst {dimension_numbers = #tpu.dot_dimension_numbers<[1], [0], [0], [1], [0, 0, 1, 1], [], []>} : vector<8x256xf32>, vector<256x64xf32>, vector<8x64xf32> -> vector<8x64xf32>
    %c0_3 = arith.constant 0 : index
    %c0_4 = arith.constant 0 : index
    %3 = vector.load %arg3[%c0_3, %c0_4] : memref<8x64xf32, #tpu.memory_space<vmem>>, vector<8x64xf32>
    tpu.vector_store %arg3[%c0_3, %c0_4], %2 {strides = array<i32>} : memref<8x64xf32, #tpu.memory_space<vmem>>, vector<8x64xf32>,
    return
  }
  func.func @transform_0(%arg0: i32) -> (i32, i32) {
    %c0_i32 = arith.constant 0 : i32
    %c0_i32_0 = arith.constant 0 : i32
    %c0_i32_1 = arith.constant 0 : i32
    return %c0_i32, %c0_i32_0 : i32, i32
  }
  func.func @transform_1(%arg0: i32) -> (i32, i32) {
    %c0_i32 = arith.constant 0 : i32
    %c0_i32_0 = arith.constant 0 : i32
    return %arg0, %c0_i32 : i32, i32
  }
  func.func @transform_2(%arg0: i32) -> (i32, i32) {
    %c0_i32 = arith.constant 0 : i32
    %c0_i32_0 = arith.constant 0 : i32
    return %arg0, %c0_i32 : i32, i32
  }
}

</mosaic_0001>

<llo_original>
// kernel: tpu_custom_call.1
$region0: #{tpu_custom_call.1}
  #allocation0 [shape = 'u32[]', space=smem, size = 0x4, offset = 0x4, fixed_abs, tag = 'smem constant byte address 0x4 - core index']
  #allocation1 [shape = 'u32[144,128]{1,0:T(1,128)}', space=vmem, size = 0x12000, scoped, tag = 'internal scratch']
  %s0 = inlined_call_operand.vmem [shape: f32[256,64], index: 0, kind: input, shape index: {}]
  %s1 = inlined_call_operand.vmem [shape: f32[8,256], index: 1, kind: input, shape index: {}]
  %s2 = inlined_call_operand.hbm [shape: f32[8,64], index: 2, kind: output, shape index: {}]
  %s3 = sld [smem:[#allocation0]]
  $region18: #{tpu_custom_call.1} parent=0
    _
  %s5 = ssub.s32 1, %s3
  %s6 = scalar_select 0, %s5, %s3
  $region1: #{tpu_custom_call.1} parent=0
    #allocation2 [shape = 'u8[4096]{0}', space=vmem, size = 0x1000, scoped, tag = 'output window, operand 0, single buffered']
    #allocation3 [shape = 's32[1]{0}', space=sflag, size = 0x4, scoped, tag = 'scoped memory for tpu_custom_call.1']
    %7 = vsyncpa [#allocation3], 0
    // Predicated region
    $region2: #{tpu_custom_call.1} parent=1 // pred_check
      _
    $region3: #{tpu_custom_call.1} parent=1 // pred_check_branch
      %9 = sbr.rel (0) target = $region5
    $region4: #{tpu_custom_call.1} parent=1 // pred_region
      _
    $region5: #{tpu_custom_call.1} parent=1 // pred_fallthru
      _
    // Predicated region
    $region6: #{tpu_custom_call.1} parent=1 // pred_check
      _
    $region7: #{tpu_custom_call.1} parent=1 // pred_check_branch
      %11 = sbr.rel (0) target = $region9
    $region8: #{tpu_custom_call.1} parent=1 // pred_region
      _
    $region9: #{tpu_custom_call.1} parent=1 // pred_fallthru
      _
    %v12 = vld [vmem:[%s1] sm:$0xff]
    %v13 = vld [vmem:[%s1 + $0x8] sm:$0xff]
    %v14 = vld [vmem:[%s0] sm:$0xff]
    %v15 = vld [vmem:[%s0 + $0x8] sm:$0xff]
    %v16 = vld [vmem:[%s0 + $0x10] sm:$0xff]
    %v17 = vld [vmem:[%s0 + $0x18] sm:$0xff]
    %v18 = vld [vmem:[%s0 + $0x20] sm:$0xff]
    %v19 = vld [vmem:[%s0 + $0x28] sm:$0xff]
    %v20 = vld [vmem:[%s0 + $0x30] sm:$0xff]
    %v21 = vld [vmem:[%s0 + $0x38] sm:$0xff]
    %v22 = vld [vmem:[%s0 + $0x40] sm:$0xff]
    %v23 = vld [vmem:[%s0 + $0x48] sm:$0xff]
    %v24 = vld [vmem:[%s0 + $0x50] sm:$0xff]
    %v25 = vld [vmem:[%s0 + $0x58] sm:$0xff]
    %v26 = vld [vmem:[%s0 + $0x60] sm:$0xff]
    %v27 = vld [vmem:[%s0 + $0x68] sm:$0xff]
    %v28 = vld [vmem:[%s0 + $0x70] sm:$0xff]
    %v29 = vld [vmem:[%s0 + $0x78] sm:$0xff]
    %v30 = vld [vmem:[%s0 + $0x80] sm:$0xff]
    %v31 = vld [vmem:[%s0 + $0x88] sm:$0xff]
    %v32 = vld [vmem:[%s0 + $0x90] sm:$0xff]
    %v33 = vld [vmem:[%s0 + $0x98] sm:$0xff]
    %v34 = vld [vmem:[%s0 + $0xa0] sm:$0xff]
    %v35 = vld [vmem:[%s0 + $0xa8] sm:$0xff]
    %v36 = vld [vmem:[%s0 + $0xb0] sm:$0xff]
    %v37 = vld [vmem:[%s0 + $0xb8] sm:$0xff]
    %v38 = vld [vmem:[%s0 + $0xc0] sm:$0xff]
    %v39 = vld [vmem:[%s0 + $0xc8] sm:$0xff]
    %v40 = vld [vmem:[%s0 + $0xd0] sm:$0xff]
    %v41 = vld [vmem:[%s0 + $0xd8] sm:$0xff]
    %v42 = vld [vmem:[%s0 + $0xe0] sm:$0xff]
    %v43 = vld [vmem:[%s0 + $0xe8] sm:$0xff]
    %v44 = vld [vmem:[%s0 + $0xf0] sm:$0xff]
    %v45 = vld [vmem:[%s0 + $0xf8] sm:$0xff]
    %46 = vmatprep.subr.mxu0 0.0
    %47 = vmatpush1.msra.mxu0 %v14
    %48 = vmatprep.subr.mxu0 0.0
    %49 = vmatpush1.msra.mxu0 %v15
    %50 = vmatprep.subr.mxu0 0.0
    %51 = vmatpush1.msra.mxu0 %v16
    %52 = vmatprep.subr.mxu0 0.0
    %53 = vmatpush1.msra.mxu0 %v17
    %54 = vmatprep.subr.mxu0 0.0
    %55 = vmatpush1.msra.mxu0 %v18
    %56 = vmatprep.subr.mxu0 0.0
    %57 = vmatpush1.msra.mxu0 %v19
    %58 = vmatprep.subr.mxu0 0.0
    %59 = vmatpush1.msra.mxu0 %v20
    %60 = vmatprep.subr.mxu0 0.0
    %61 = vmatpush1.msra.mxu0 %v21
    %62 = vmatprep.subr.mxu0 0.0
    %63 = vmatpush1.msra.mxu0 %v22
    %64 = vmatprep.subr.mxu0 0.0
    %65 = vmatpush1.msra.mxu0 %v23
    %66 = vmatprep.subr.mxu0 0.0
    %67 = vmatpush1.msra.mxu0 %v24
    %68 = vmatprep.subr.mxu0 0.0
    %69 = vmatpush1.msra.mxu0 %v25
    %70 = vmatprep.subr.mxu0 0.0
    %71 = vmatpush1.msra.mxu0 %v26
    %72 = vmatprep.subr.mxu0 0.0
    %73 = vmatpush1.msra.mxu0 %v27
    %74 = vmatprep.subr.mxu0 0.0
    %75 = vmatpush1.msra.mxu0 %v28
    %76 = vmatprep.subr.mxu0 0.0
    %77 = vmatpush1.msra.mxu0 %v29
    %78 = vmatprep.subr.mxu0 0.0
    %79 = vmatpush1.msra.mxu0 %v30
    %80 = vmatprep.subr.mxu0 0.0
    %81 = vmatpush1.msra.mxu0 %v31
    %82 = vmatprep.subr.mxu0 0.0
    %83 = vmatpush1.msra.mxu0 %v32
    %84 = vmatprep.subr.mxu0 0.0
    %85 = vmatpush1.msra.mxu0 %v33
    %86 = vmatprep.subr.mxu0 0.0
    %87 = vmatpush1.msra.mxu0 %v34
    %88 = vmatprep.subr.mxu0 0.0
    %89 = vmatpush1.msra.mxu0 %v35
    %90 = vmatprep.subr.mxu0 0.0
    %91 = vmatpush1.msra.mxu0 %v36
    %92 = vmatprep.subr.mxu0 0.0
    %93 = vmatpush1.msra.mxu0 %v37
    %94 = vmatprep.subr.mxu0 0.0
    %95 = vmatpush1.msra.mxu0 %v38
    %96 = vmatprep.subr.mxu0 0.0
    %97 = vmatpush1.msra.mxu0 %v39
    %98 = vmatprep.subr.mxu0 0.0
    %99 = vmatpush1.msra.mxu0 %v40
    %100 = vmatprep.subr.mxu0 0.0
    %101 = vmatpush1.msra.mxu0 %v41
    %102 = vmatprep.subr.mxu0 0.0
    %103 = vmatpush1.msra.mxu0 %v42
    %104 = vmatprep.subr.mxu0 0.0
    %105 = vmatpush1.msra.mxu0 %v43
    %106 = vmatprep.subr.mxu0 0.0
    %107 = vmatpush1.msra.mxu0 %v44
    %108 = vmatprep.subr.mxu0 0.0
    %109 = vmatpush1.msra.mxu0 %v45
    %110 = vmatprep.mubr.f32.mxu0 %v13
    %111 = vmatmul.mubr.f32.gmra.mrb[0].mxu0 %v12
    %v112 = vpop.f32.mrb[0].mxu0
    %v113 = vadd.f32 0.0, %v112
    %v114 = vpop.f32.mrb[0].mxu0
    %115 = vdwg.mxu0
    %vm116 = vcmask 523264
    %117 = vst.msk [vmem:[#allocation2] sm:$0xff] %vm116, %v113
    // Predicated region
    $region10: #{tpu_custom_call.1} parent=1 // pred_check
      _
    $region11: #{tpu_custom_call.1} parent=1 // pred_check_branch
      %119 = sbr.rel (0) target = $region13
    $region12: #{tpu_custom_call.1} parent=1 // pred_region
      %s121 = ssub.s32 128, 128
      %122 = vsyncadd [#allocation3], %s121
      %s124 = sshll.u32 [#allocation2], 4
      %s125 = int_to_ptr.vmem [resolvable:$true] %s124
      %127 = dma.vmem_to_hbm [thread:$0]  %s125, 128, %s2, [#allocation3]
    $region13: #{tpu_custom_call.1} parent=1 // pred_fallthru
      _
    // Predicated region
    $region14: #{tpu_custom_call.1} parent=1 // pred_check
      _
    $region15: #{tpu_custom_call.1} parent=1 // pred_check_branch
      %129 = sbr.rel (0) target = $region17
    $region16: #{tpu_custom_call.1} parent=1 // pred_region
      %130 = dma.done [#allocation3], 128
    $region17: #{tpu_custom_call.1} parent=1 // pred_fallthru
      _
    %131 = vsyncpa [#allocation3], 1

</llo_original>
